<compile_context>
chip_gen: v7x
topology: tpu7x:2x2x1
jax: 0.10.0
libtpu: 0.0.40
codegen_flags: <defaults>
</compile_context>

<pallas_src>
import jax
import jax.numpy as jnp
from jax.experimental import pallas as pl
from jax.experimental.pallas import tpu as pltpu


def _round_up(x: int, m: int) -> int:
    return ((x + m - 1) // m) * m


def mlp_kernel(x_ref, w1_ref, b1_ref, w2_ref, b2_ref, o_ref):
    # x: (TB, F) f32/bf16, w1: (F, H) bf16, b1: (1, H) f32,
    # w2: (H, O) bf16, b2: (1, O) f32, o: (TB, O) out_dtype
    x = x_ref[...].astype(w1_ref.dtype)               # cast in VMEM (free under MXU)
    h = jnp.dot(x, w1_ref[...], preferred_element_type=jnp.float32)
    h = jnp.maximum(h + b1_ref[...], 0.0)             # bias + ReLU in f32 (VPU)
    h = h.astype(w2_ref.dtype)                        # back to bf16 for the MXU
    out = jnp.dot(h, w2_ref[...], preferred_element_type=jnp.float32)
    o_ref[...] = (out + b2_ref[...]).astype(o_ref.dtype)  # cast fused into store


def prepare_params(w1, b1, w2, b2, compute_dtype=jnp.bfloat16):
    """One-time weight prep: bf16 matmul operands, f32 bias rows.

    Call once at load time so per-inference calls of mlp_forward do not
    re-materialize bf16 weight copies in HBM.
    """
    H = w1.shape[1]
    O = w2.shape[1]
    return (w1.astype(compute_dtype),
            b1.reshape(1, H).astype(jnp.float32),
            w2.astype(compute_dtype),
            b2.reshape(1, O).astype(jnp.float32))


def _choose_batch_tile(B: int) -> int:
    # Multiples of 8 (sublane), <= 512 rows, at least 2 grid steps once the
    # batch is big enough so dimension_semantics=("parallel",) can shard the
    # grid across v7x's two TensorCores; 256-aligned tiles for large B keep
    # the 256x256 MXU (v6e/v7x) well fed.
    if B >= 1024:
        return 512
    if B >= 512:
        return 256
    return min(256, _round_up((B + 1) // 2, 8))


def mlp_forward(x, params):
    """x: (B, ...) -> flatten -> Linear(F,128) -> ReLU -> Linear(128,O).

    `params` must come from prepare_params (bf16 weights, f32 bias rows).
    """
    w1, b1, w2, b2 = params
    B = x.shape[0]
    x2d = x.reshape(B, -1)                            # torch: x.view(x.size(0), -1)
    F = x2d.shape[1]
    H = w1.shape[1]
    O = w2.shape[1]
    out_dtype = x.dtype

    if B <= 8:
        # Tiny batch: single invocation, whole arrays as blocks, no grid, no
        # padding, no extra wrapper-side XLA passes.
        return pl.pallas_call(
            mlp_kernel,
            out_shape=jax.ShapeDtypeStruct((B, O), out_dtype),
        )(x2d, w1, b1, w2, b2)

    TB = _choose_batch_tile(B)
    grid = (pl.cdiv(B, TB),)   # partial last block: OOB reads undefined (rows are
                               # independent), OOB writes masked by Pallas.

    cost = pl.CostEstimate(
        flops=2 * B * (F * H + H * O),
        transcendentals=0,
        bytes_accessed=(x2d.size * x2d.dtype.itemsize
                        + w1.size * w1.dtype.itemsize
                        + w2.size * w2.dtype.itemsize
                        + b1.size * 4 + b2.size * 4
                        + B * O * jnp.dtype(out_dtype).itemsize),
    )

    # TODO(synk): if F (input_size) ever grows so large that the pinned W1
    # block no longer fits v7x's 64 MiB VMEM, add a K grid axis ("arbitrary")
    # with an f32 VMEM accumulator instead of pinning the whole W1.
    return pl.pallas_call(
        mlp_kernel,
        out_shape=jax.ShapeDtypeStruct((B, O), out_dtype),
        grid=grid,
        in_specs=[
            pl.BlockSpec((TB, F), lambda i: (i, 0)),   # activations streamed per tile
            pl.BlockSpec((F, H), lambda i: (0, 0)),    # W1 pinned in VMEM
            pl.BlockSpec((1, H), lambda i: (0, 0)),    # b1 pinned in VMEM
            pl.BlockSpec((H, O), lambda i: (0, 0)),    # W2 pinned in VMEM (no lane pad)
            pl.BlockSpec((1, O), lambda i: (0, 0)),    # b2 pinned in VMEM
        ],
        out_specs=pl.BlockSpec((TB, O), lambda i: (i, 0)),
        compiler_params=pltpu.CompilerParams(
            dimension_semantics=("parallel",),          # megacore-shardable batch axis
            vmem_limit_bytes=48 * 1024 * 1024,          # headroom under v7x's 64 MiB
        ),
        cost_estimate=cost,
    )(x2d, w1, b1, w2, b2)


if __name__ == "__main__":
    key = jax.random.PRNGKey(0)
    kx, kp, kx2 = jax.random.split(key, 3)

    B, C, Hs, Ws = 2, 4, 4, 4          # x of shape (2, 4, 4, 4) -> F = 64
    input_size = C * Hs * Ws
    hidden = 128
    output_size = 32

    # Deterministic init mimicking nn.Linear's uniform(-1/sqrt(fan_in), ...).
    k1, k2, k3, k4 = jax.random.split(kp, 4)
    bound1 = 1.0 / (input_size ** 0.5)
    bound2 = 1.0 / (hidden ** 0.5)
    w1 = jax.random.uniform(k1, (input_size, hidden), jnp.float32, -bound1, bound1)
    b1 = jax.random.uniform(k2, (hidden,), jnp.float32, -bound1, bound1)
    w2 = jax.random.uniform(k3, (hidden, output_size), jnp.float32, -bound2, bound2)
    b2 = jax.random.uniform(k4, (output_size,), jnp.float32, -bound2, bound2)

    params = prepare_params(w1, b1, w2, b2)            # once, at load time

    def ref_f32(xa):
        x2d = xa.reshape(xa.shape[0], -1)
        return jnp.maximum(x2d @ w1 + b1, 0.0) @ w2 + b2

    def ref_bf16(xa):
        bf = lambda a: a.astype(jnp.bfloat16).astype(jnp.float32)
        x2d = xa.reshape(xa.shape[0], -1)
        h = jnp.maximum(bf(x2d) @ bf(w1) + b1, 0.0)
        return bf(h) @ bf(w2) + b2

    # (1) tiny batch -> gridless path (the shipped B=2 case).
    x = jax.random.normal(kx, (B, C, Hs, Ws), jnp.float32)
    out = jax.block_until_ready(mlp_forward(x, params))
    assert out.shape == (B, output_size)
    assert jnp.allclose(out, ref_bf16(x), atol=1e-3, rtol=1e-3)
    assert jnp.allclose(out, ref_f32(x), atol=5e-2, rtol=5e-2)

    # (2) larger batch -> grid path with >=2 "parallel" steps and a partial
    #     last batch block (masked writes).
    B2 = 300
    x_big = jax.random.normal(kx2, (B2, C, Hs, Ws), jnp.float32)
    out_big = jax.block_until_ready(mlp_forward(x_big, params))
    assert out_big.shape == (B2, output_size)
    assert jnp.allclose(out_big, ref_bf16(x_big), atol=1e-3, rtol=1e-3)
    assert jnp.allclose(out_big, ref_f32(x_big), atol=5e-2, rtol=5e-2)

    print("KERNEL_OK")
</pallas_src>

<mosaic_0001>
module attributes {stable_mosaic.version = 11 : i64} {
  func.func @mlp_kernel(%arg0: memref<2x64xf32, #tpu.memory_space<vmem>>, %arg1: memref<64x128xbf16, #tpu.memory_space<vmem>>, %arg2: memref<1x128xf32, #tpu.memory_space<vmem>>, %arg3: memref<128x32xbf16, #tpu.memory_space<vmem>>, %arg4: memref<1x32xf32, #tpu.memory_space<vmem>>, %arg5: memref<2x32xf32, #tpu.memory_space<vmem>>) attributes {dimension_semantics = [], scalar_prefetch = 0 : i64, scratch_operands = 0 : i64, tpu.core_type = #tpu.core_type<tc>} {
    %c0 = arith.constant 0 : index
    %c0_0 = arith.constant 0 : index
    %0 = vector.load %arg0[%c0, %c0_0] : memref<2x64xf32, #tpu.memory_space<vmem>>, vector<2x64xf32>
    %1 = arith.truncf %0 : vector<2x64xf32> to vector<2x64xbf16>
    %c0_1 = arith.constant 0 : index
    %c0_2 = arith.constant 0 : index
    %2 = vector.load %arg1[%c0_1, %c0_2] : memref<64x128xbf16, #tpu.memory_space<vmem>>, vector<64x128xbf16>
    %cst = arith.constant dense<0.000000e+00> : vector<2x128xf32>
    %3 = tpu.matmul %1, %2, %cst {dimension_numbers = #tpu.dot_dimension_numbers<[1], [0], [0], [1], [0, 0, 1, 1], [], []>} : vector<2x64xbf16>, vector<64x128xbf16>, vector<2x128xf32> -> vector<2x128xf32>
    %c0_3 = arith.constant 0 : index
    %c0_4 = arith.constant 0 : index
    %4 = vector.load %arg2[%c0_3, %c0_4] : memref<1x128xf32, #tpu.memory_space<vmem>>, vector<1x128xf32>
    %5 = vector.broadcast %4 : vector<1x128xf32> to vector<2x128xf32>
    %6 = arith.addf %3, %5 : vector<2x128xf32>
    %cst_5 = arith.constant 0.000000e+00 : f32
    %7 = vector.broadcast %cst_5 : f32 to vector<2x128xf32>
    %8 = arith.maximumf %6, %7 : vector<2x128xf32>
    %9 = arith.truncf %8 : vector<2x128xf32> to vector<2x128xbf16>
    %c0_6 = arith.constant 0 : index
    %c0_7 = arith.constant 0 : index
    %10 = vector.load %arg3[%c0_6, %c0_7] : memref<128x32xbf16, #tpu.memory_space<vmem>>, vector<128x32xbf16>
    %cst_8 = arith.constant dense<0.000000e+00> : vector<2x32xf32>
    %11 = tpu.matmul %9, %10, %cst_8 {dimension_numbers = #tpu.dot_dimension_numbers<[1], [0], [0], [1], [0, 0, 1, 1], [], []>} : vector<2x128xbf16>, vector<128x32xbf16>, vector<2x32xf32> -> vector<2x32xf32>
    %c0_9 = arith.constant 0 : index
    %c0_10 = arith.constant 0 : index
    %12 = vector.load %arg4[%c0_9, %c0_10] : memref<1x32xf32, #tpu.memory_space<vmem>>, vector<1x32xf32>
    %13 = vector.broadcast %12 : vector<1x32xf32> to vector<2x32xf32>
    %14 = arith.addf %11, %13 : vector<2x32xf32>
    %c0_11 = arith.constant 0 : index
    %c0_12 = arith.constant 0 : index
    %15 = vector.load %arg5[%c0_11, %c0_12] : memref<2x32xf32, #tpu.memory_space<vmem>>, vector<2x32xf32>
    tpu.vector_store %arg5[%c0_11, %c0_12], %14 {strides = array<i32>} : memref<2x32xf32, #tpu.memory_space<vmem>>, vector<2x32xf32>,
    return
  }
}

</mosaic_0001>

<llo_original>
// kernel: tpu_custom_call.1
$region0: #{tpu_custom_call.1}
  #allocation0 [shape = 'u32[]', space=smem, size = 0x4, offset = 0x4, fixed_abs, tag = 'smem constant byte address 0x4 - core index']
  #allocation1 [shape = 'u32[144,128]{1,0:T(1,128)}', space=vmem, size = 0x12000, scoped, tag = 'internal scratch']
  %s0 = inlined_call_operand.vmem [shape: f32[2,64], index: 0, kind: input, shape index: {}]
  %s1 = inlined_call_operand.vmem [shape: bf16[64,128], index: 1, kind: input, shape index: {}]
  %s2 = inlined_call_operand.vmem [shape: f32[1,128], index: 2, kind: input, shape index: {}]
  %s3 = inlined_call_operand.vmem [shape: bf16[128,32], index: 3, kind: input, shape index: {}]
  %s4 = inlined_call_operand.vmem [shape: f32[1,32], index: 4, kind: input, shape index: {}]
  %s5 = inlined_call_operand.hbm [shape: f32[2,32], index: 5, kind: output, shape index: {}]
  %s6 = sld [smem:[#allocation0]]
  $region30: #{tpu_custom_call.1} parent=0
    _
  %s8 = ssub.s32 1, %s6
  %s9 = scalar_select 0, %s8, %s6
  $region1: #{tpu_custom_call.1} parent=0
    #allocation2 [shape = 'u8[1024]{0}', space=vmem, size = 0x400, scoped, tag = 'output window, operand 0, single buffered']
    #allocation3 [shape = 's32[1]{0}', space=sflag, size = 0x4, scoped, tag = 'scoped memory for tpu_custom_call.1']
    %10 = vsyncpa [#allocation3], 0
    // Predicated region
    $region2: #{tpu_custom_call.1} parent=1 // pred_check
      _
    $region3: #{tpu_custom_call.1} parent=1 // pred_check_branch
      %12 = sbr.rel (0) target = $region5
    $region4: #{tpu_custom_call.1} parent=1 // pred_region
      _
    $region5: #{tpu_custom_call.1} parent=1 // pred_fallthru
      _
    // Predicated region
    $region6: #{tpu_custom_call.1} parent=1 // pred_check
      _
    $region7: #{tpu_custom_call.1} parent=1 // pred_check_branch
      %14 = sbr.rel (0) target = $region9
    $region8: #{tpu_custom_call.1} parent=1 // pred_region
      _
    $region9: #{tpu_custom_call.1} parent=1 // pred_fallthru
      _
    // Predicated region
    $region10: #{tpu_custom_call.1} parent=1 // pred_check
      _
    $region11: #{tpu_custom_call.1} parent=1 // pred_check_branch
      %16 = sbr.rel (0) target = $region13
    $region12: #{tpu_custom_call.1} parent=1 // pred_region
      _
    $region13: #{tpu_custom_call.1} parent=1 // pred_fallthru
      _
    // Predicated region
    $region14: #{tpu_custom_call.1} parent=1 // pred_check
      _
    $region15: #{tpu_custom_call.1} parent=1 // pred_check_branch
      %18 = sbr.rel (0) target = $region17
    $region16: #{tpu_custom_call.1} parent=1 // pred_region
      _
    $region17: #{tpu_custom_call.1} parent=1 // pred_fallthru
      _
    // Predicated region
    $region18: #{tpu_custom_call.1} parent=1 // pred_check
      _
    $region19: #{tpu_custom_call.1} parent=1 // pred_check_branch
      %20 = sbr.rel (0) target = $region21
    $region20: #{tpu_custom_call.1} parent=1 // pred_region
      _
    $region21: #{tpu_custom_call.1} parent=1 // pred_fallthru
      _
    %v22 = vld [vmem:[%s0] sm:$0x3]
    %v23 = vpack.c.bf16 %v22, %v22
    %v24 = vld [vmem:[%s1] sm:$0xf]
    %v25 = vld [vmem:[%s1 + $0x4] sm:$0xf]
    %v26 = vld [vmem:[%s1 + $0x8] sm:$0xf]
    %v27 = vld [vmem:[%s1 + $0xc] sm:$0xf]
    %v28 = vld [vmem:[%s1 + $0x10] sm:$0xf]
    %v29 = vld [vmem:[%s1 + $0x14] sm:$0xf]
    %v30 = vld [vmem:[%s1 + $0x18] sm:$0xf]
    %v31 = vld [vmem:[%s1 + $0x1c] sm:$0xf]
    %v32 = vld [vmem:[%s2] sm:$0x1]
    %v34 = vlaneseq
    %v35 = vshrl.u32 %v34, 7
    %v36 = vsub.s32 0, %v35
    %v37 = vrot.slane %v32, %v36
    %v47 = vunpack.c.l.b16 %v24
    %v48 = vunpack.c.l.b16 %v25
    %v49 = vunpack.c.l.b16 %v26
    %v50 = vunpack.c.l.b16 %v27
    %v51 = vunpack.c.l.b16 %v28
    %v52 = vunpack.c.l.b16 %v29
    %v53 = vunpack.c.l.b16 %v30
    %v54 = vunpack.c.l.b16 %v31
    %v55 = vpack.c.b16 %v48, %v47
    %v56 = vpack.c.b16 %v50, %v49
    %v57 = vpack.c.b16 %v52, %v51
    %v58 = vpack.c.b16 %v54, %v53
    %vm63 = vcmask 523264
    %v65 = vsel %vm63, %v23, 0
    %67 = vmatprep.subr.bf16.mxu0 0
    %68 = vmatpush1.bf16.msra.mxu0 %v55
    %69 = vmatprep.subr.bf16.mxu0 0
    %70 = vmatpush1.bf16.msra.mxu0 %v56
    %71 = vmatprep.subr.bf16.mxu0 0
    %72 = vmatpush1.bf16.msra.mxu0 %v57
    %73 = vmatprep.subr.bf16.mxu0 0
    %74 = vmatpush1.bf16.msra.mxu0 %v58
    %75 = vmatprep.subr.bf16.mxu0 0
    %76 = vmatpush1.bf16.msra.mxu0 0
    %77 = vmatprep.subr.bf16.mxu0 0
    %78 = vmatpush1.bf16.msra.mxu0 0
    %79 = vmatprep.subr.bf16.mxu0 0
    %80 = vmatpush1.bf16.msra.mxu0 0
    %81 = vmatprep.subr.bf16.mxu0 0
    %82 = vmatpush1.bf16.msra.mxu0 0
    %83 = vmatprep.subr.bf16.mxu0 0
    %84 = vmatpush1.bf16.msra.mxu0 0
    %85 = vmatprep.subr.bf16.mxu0 0
    %86 = vmatpush1.bf16.msra.mxu0 0
    %87 = vmatprep.subr.bf16.mxu0 0
    %88 = vmatpush1.bf16.msra.mxu0 0
    %89 = vmatprep.subr.bf16.mxu0 0
    %90 = vmatpush1.bf16.msra.mxu0 0
    %91 = vmatprep.subr.bf16.mxu0 0
    %92 = vmatpush1.bf16.msra.mxu0 0
    %93 = vmatprep.subr.bf16.mxu0 0
    %94 = vmatpush1.bf16.msra.mxu0 0
    %95 = vmatprep.subr.bf16.mxu0 0
    %96 = vmatpush1.bf16.msra.mxu0 0
    %97 = vmatprep.subr.bf16.mxu0 0
    %98 = vmatpush1.bf16.msra.mxu0 0
    %99 = vmatprep.mubr.bf16.mxu0 0
    %100 = vmatmul.mubr.bf16.gmra.mrb[0].mxu0 %v65
    %v101 = vpop.f32.mrb[0].mxu0
    %v102 = vadd.f32 %v37, %v101
    %v103 = vpop.f32.mrb[0].mxu0
    %v104 = vpop.f32.mrb[0].mxu0
    %v105 = vpop.f32.mrb[0].mxu0
    %106 = vdwg.mxu0
    %v107 = vmax.f32 %v102, 0.0
    %v108 = vpack.c.bf16 %v107, %v107
    %v109 = vld [vmem:[%s3] sm:$0xf]
    %v110 = vld [vmem:[%s3 + $0x4] sm:$0xf]
    %v111 = vld [vmem:[%s3 + $0x8] sm:$0xf]
    %v112 = vld [vmem:[%s3 + $0xc] sm:$0xf]
    %v113 = vld [vmem:[%s3 + $0x10] sm:$0xf]
    %v114 = vld [vmem:[%s3 + $0x14] sm:$0xf]
    %v115 = vld [vmem:[%s3 + $0x18] sm:$0xf]
    %v116 = vld [vmem:[%s3 + $0x1c] sm:$0xf]
    %v117 = vld [vmem:[%s3 + $0x20] sm:$0xf]
    %v118 = vld [vmem:[%s3 + $0x24] sm:$0xf]
    %v119 = vld [vmem:[%s3 + $0x28] sm:$0xf]
    %v120 = vld [vmem:[%s3 + $0x2c] sm:$0xf]
    %v121 = vld [vmem:[%s3 + $0x30] sm:$0xf]
    %v122 = vld [vmem:[%s3 + $0x34] sm:$0xf]
    %v123 = vld [vmem:[%s3 + $0x38] sm:$0xf]
    %v124 = vld [vmem:[%s3 + $0x3c] sm:$0xf]
    %v125 = vld [vmem:[%s4] sm:$0x1]
    %v127 = vlaneseq
    %v128 = vshrl.u32 %v127, 7
    %v129 = vsub.s32 0, %v128
    %v130 = vrot.slane %v125, %v129
    %v148 = vunpack.c.l.b16 %v109
    %v149 = vunpack.c.l.b16 %v110
    %v150 = vunpack.c.l.b16 %v111
    %v151 = vunpack.c.l.b16 %v112
    %v152 = vunpack.c.l.b16 %v113
    %v153 = vunpack.c.l.b16 %v114
    %v154 = vunpack.c.l.b16 %v115
    %v155 = vunpack.c.l.b16 %v116
    %v156 = vunpack.c.l.b16 %v117
    %v157 = vunpack.c.l.b16 %v118
    %v158 = vunpack.c.l.b16 %v119
    %v159 = vunpack.c.l.b16 %v120
    %v160 = vunpack.c.l.b16 %v121
    %v161 = vunpack.c.l.b16 %v122
    %v162 = vunpack.c.l.b16 %v123
    %v163 = vunpack.c.l.b16 %v124
    %v164 = vpack.c.b16 %v149, %v148
    %v165 = vpack.c.b16 %v151, %v150
    %v166 = vpack.c.b16 %v153, %v152
    %v167 = vpack.c.b16 %v155, %v154
    %v168 = vpack.c.b16 %v157, %v156
    %v169 = vpack.c.b16 %v159, %v158
    %v170 = vpack.c.b16 %v161, %v160
    %v171 = vpack.c.b16 %v163, %v162
    %180 = vmatprep.subr.bf16.mxu0 0
    %181 = vmatpush1.bf16.msra.mxu0 %v164
    %182 = vmatprep.subr.bf16.mxu0 0
    %183 = vmatpush1.bf16.msra.mxu0 %v165
    %184 = vmatprep.subr.bf16.mxu0 0
    %185 = vmatpush1.bf16.msra.mxu0 %v166
    %186 = vmatprep.subr.bf16.mxu0 0
    %187 = vmatpush1.bf16.msra.mxu0 %v167
    %188 = vmatprep.subr.bf16.mxu0 0
    %189 = vmatpush1.bf16.msra.mxu0 %v168
    %190 = vmatprep.subr.bf16.mxu0 0
    %191 = vmatpush1.bf16.msra.mxu0 %v169
    %192 = vmatprep.subr.bf16.mxu0 0
    %193 = vmatpush1.bf16.msra.mxu0 %v170
    %194 = vmatprep.subr.bf16.mxu0 0
    %195 = vmatpush1.bf16.msra.mxu0 %v171
    %196 = vmatprep.subr.bf16.mxu0 0
    %197 = vmatpush1.bf16.msra.mxu0 0
    %198 = vmatprep.subr.bf16.mxu0 0
    %199 = vmatpush1.bf16.msra.mxu0 0
    %200 = vmatprep.subr.bf16.mxu0 0
    %201 = vmatpush1.bf16.msra.mxu0 0
    %202 = vmatprep.subr.bf16.mxu0 0
    %203 = vmatpush1.bf16.msra.mxu0 0
    %204 = vmatprep.subr.bf16.mxu0 0
    %205 = vmatpush1.bf16.msra.mxu0 0
    %206 = vmatprep.subr.bf16.mxu0 0
    %207 = vmatpush1.bf16.msra.mxu0 0
    %208 = vmatprep.subr.bf16.mxu0 0
    %209 = vmatpush1.bf16.msra.mxu0 0
    %210 = vmatprep.subr.bf16.mxu0 0
    %211 = vmatpush1.bf16.msra.mxu0 0
    %212 = vmatprep.mubr.bf16.mxu0 0
    %213 = vmatmul.mubr.bf16.gmra.mrb[0].mxu0 %v108
    %v214 = vpop.f32.mrb[0].mxu0
    %v215 = vadd.f32 %v130, %v214
    %v216 = vpop.f32.mrb[0].mxu0
    %v217 = vpop.f32.mrb[0].mxu0
    %v218 = vpop.f32.mrb[0].mxu0
    %219 = vdwg.mxu0
    %vm220 = vcmask 254976
    %221 = vst.msk [vmem:[#allocation2] sm:$0x3] %vm220, %v215
    // Predicated region
    $region22: #{tpu_custom_call.1} parent=1 // pred_check
      _
    $region23: #{tpu_custom_call.1} parent=1 // pred_check_branch
      %223 = sbr.rel (0) target = $region25
    $region24: #{tpu_custom_call.1} parent=1 // pred_region
      %s225 = ssub.s32 32, 32
      %226 = vsyncadd [#allocation3], %s225
      %s228 = sshll.u32 [#allocation2], 4
      %s229 = int_to_ptr.vmem [resolvable:$true] %s228
      %231 = dma.vmem_to_hbm [thread:$0]  %s229, 32, %s5, [#allocation3]
    $region25: #{tpu_custom_call.1} parent=1 // pred_fallthru
      _
    // Predicated region
    $region26: #{tpu_custom_call.1} parent=1 // pred_check
      _
    $region27: #{tpu_custom_call.1} parent=1 // pred_check_branch
      %233 = sbr.rel (0) target = $region29
    $region28: #{tpu_custom_call.1} parent=1 // pred_region
      %234 = dma.done [#allocation3], 32
    $region29: #{tpu_custom_call.1} parent=1 // pred_fallthru
      _
    %235 = vsyncpa [#allocation3], 1

</llo_original>
